<compile_context>
chip_gen: v5e
topology: v5e:2x2
jax: 0.10.0
libtpu: 0.0.40
codegen_flags: <defaults>
</compile_context>

<pallas_src>
import jax
import jax.numpy as jnp
from jax.experimental import pallas as pl
from jax.experimental.pallas import tpu as pltpu


# ---------------------------------------------------------------------------
# Kernel
# ---------------------------------------------------------------------------
def _elu(v):
    # ELU(alpha=1): x if x > 0 else exp(x) - 1 (no clamp; where discards +inf).
    return jnp.where(v > 0, v, jnp.exp(v) - 1.0)


def gating_kernel(x_ref, w1_ref, b1_ref, w2_ref, b2_ref, w3_ref, b3_ref,
                  w4_ref, b4_ref, o_ref):
    # x_ref : (TM, 128) f32 row-tile of padded inputs [z | prev_pose | 0...]
    # w*_ref: bf16 weights, already (in, out) and zero-padded to tile sizes
    # b*_ref: (1, out) f32 biases (broadcast over the TM rows by the add)
    # Dots run natively as bf16 x bf16 with f32 accumulation (fast MXU path).
    x = x_ref[...].astype(jnp.bfloat16)                               # (TM, 128)
    h = _elu(jnp.dot(x, w1_ref[...],
                     preferred_element_type=jnp.float32) + b1_ref[...])
    h = _elu(jnp.dot(h.astype(jnp.bfloat16), w2_ref[...],
                     preferred_element_type=jnp.float32) + b2_ref[...])
    h = _elu(jnp.dot(h.astype(jnp.bfloat16), w3_ref[...],
                     preferred_element_type=jnp.float32) + b3_ref[...])
    o_ref[...] = jnp.dot(h.astype(jnp.bfloat16), w4_ref[...],
                         preferred_element_type=jnp.float32) + b4_ref[...]


# ---------------------------------------------------------------------------
# One-time parameter packing (hoisted out of the per-call path)
# ---------------------------------------------------------------------------
def _pad2d(a, rows, cols, dtype):
    out = jnp.zeros((rows, cols), dtype)
    return out.at[: a.shape[0], : a.shape[1]].set(a.astype(dtype))


def pack_params(params):
    """Transpose, zero-pad, bf16-cast weights; biases as (1, out) f32. Run once."""
    w1, b1, w2, b2, w3, b3, w4, b4 = params
    w1_p = _pad2d(w1.T, 128, 256, jnp.bfloat16)     # (94,256)  -> (128,256)
    w2_p = w2.T.astype(jnp.bfloat16)                # (256,256)
    w3_p = w3.T.astype(jnp.bfloat16)                # (256,256)
    w4_p = _pad2d(w4.T, 256, 128, jnp.bfloat16)     # (256,6)   -> (256,128)
    b1_p = b1.astype(jnp.float32)[None, :]                               # (1,256)
    b2_p = b2.astype(jnp.float32)[None, :]                               # (1,256)
    b3_p = b3.astype(jnp.float32)[None, :]                               # (1,256)
    b4_p = jnp.zeros((1, 128), jnp.float32).at[0, :6].set(
        b4.astype(jnp.float32))                                          # (1,128)
    return (w1_p, b1_p, w2_p, b2_p, w3_p, b3_p, w4_p, b4_p)


# ---------------------------------------------------------------------------
# Tile-size selection (static, from Python batch size)
# ---------------------------------------------------------------------------
def _round_up(x, m):
    return ((x + m - 1) // m) * m


def _choose_tm(batch):
    bp8 = _round_up(max(int(batch), 1), 8)
    if bp8 <= 8:
        return 8
    # >= 2 grid steps so v7x's two TensorCores both get work; cap rows at 128
    # (matches v5e's MXU height, still large enough on v6e/v7x).
    return min(_round_up(-(-bp8 // 2), 8), 128)


# ---------------------------------------------------------------------------
# pallas_call wrapper (shared by single-vector and batched paths)
# ---------------------------------------------------------------------------
def _forward_padded(x_pad, packed, tm):
    """x_pad: (Bp, 128) f32 with Bp a multiple of tm -> (Bp, 128) f32."""
    w1_p, b1_p, w2_p, b2_p, w3_p, b3_p, w4_p, b4_p = packed
    n_blk = x_pad.shape[0] // tm
    const = lambda t: (0, 0)   # weights/biases: same block every step -> VMEM-resident
    return pl.pallas_call(
        gating_kernel,
        out_shape=jax.ShapeDtypeStruct((x_pad.shape[0], 128), jnp.float32),
        grid=(n_blk,),
        in_specs=[
            pl.BlockSpec((tm, 128), lambda t: (t, 0)),     # x row-tile
            pl.BlockSpec((128, 256), const),               # w1 (bf16)
            pl.BlockSpec((1, 256), const),                 # b1
            pl.BlockSpec((256, 256), const),               # w2 (bf16)
            pl.BlockSpec((1, 256), const),                 # b2
            pl.BlockSpec((256, 256), const),               # w3 (bf16)
            pl.BlockSpec((1, 256), const),                 # b3
            pl.BlockSpec((256, 128), const),               # w4 (bf16)
            pl.BlockSpec((1, 128), const),                 # b4
        ],
        out_specs=pl.BlockSpec((tm, 128), lambda t: (t, 0)),
        compiler_params=pltpu.CompilerParams(
            dimension_semantics=("parallel",)),            # v7x: split batch over 2 TCs
    )(x_pad, w1_p, b1_p, w2_p, b2_p, w3_p, b3_p, w4_p, b4_p)


@jax.jit
def gating_network_forward(z, prev_pose, packed):
    """z: (32,), prev_pose: (62,) -> (6,) float32.  Module-equivalent forward."""
    x = jnp.zeros((8, 128), jnp.float32)
    x = x.at[0, :32].set(z.astype(jnp.float32))
    x = x.at[0, 32:94].set(prev_pose.astype(jnp.float32))
    return _forward_padded(x, packed, 8)[0, :6]


@jax.jit
def gating_network_forward_batch(z_batch, pose_batch, packed):
    """z_batch: (B, 32), pose_batch: (B, 62) -> (B, 6).  Amortizes weight DMA."""
    B = z_batch.shape[0]
    tm = _choose_tm(B)
    Bp = _round_up(B, tm)
    x = jnp.zeros((Bp, 128), jnp.float32)
    x = x.at[:B, :32].set(z_batch.astype(jnp.float32))
    x = x.at[:B, 32:94].set(pose_batch.astype(jnp.float32))
    return _forward_padded(x, packed, tm)[:B, :6]


# ---------------------------------------------------------------------------
# Parameter init (PyTorch nn.Linear-style U(-1/sqrt(fan_in), 1/sqrt(fan_in)))
# ---------------------------------------------------------------------------
def init_params(key):
    dims = [(256, 94), (256, 256), (256, 256), (6, 256)]
    params = []
    for (out_f, in_f) in dims:
        key, kw, kb = jax.random.split(key, 3)
        bound = 1.0 / jnp.sqrt(jnp.float32(in_f))
        w = jax.random.uniform(kw, (out_f, in_f), jnp.float32, -bound, bound)
        b = jax.random.uniform(kb, (out_f,), jnp.float32, -bound, bound)
        params.extend([w, b])
    return tuple(params)


if __name__ == "__main__":
    key = jax.random.PRNGKey(0)
    kp, kz, kpose = jax.random.split(key, 3)

    params = init_params(kp)
    packed = pack_params(params)              # one-time packing (not per call)

    z = jax.random.normal(kz, (32,), jnp.float32)
    prev_pose = jax.random.normal(kpose, (62,), jnp.float32)

    out = gating_network_forward(z, prev_pose, packed)
    out = jax.block_until_ready(out)
    assert out.shape == (6,) and out.dtype == jnp.float32

    # Plain-JAX reference mirroring the kernel's dtype handling (weights and
    # dot inputs rounded through bf16, f32 accumulation) so only accumulation
    # order / exp-vs-expm1 differ.
    w1, b1, w2, b2, w3, b3, w4, b4 = params
    rd = lambda a: a.astype(jnp.bfloat16).astype(jnp.float32)

    def ref_forward(zv, pv):
        elu = lambda v: jnp.where(v > 0, v, jnp.expm1(v))
        x = rd(jnp.concatenate([zv, pv]))
        h = elu(x @ rd(w1).T + b1)
        h = elu(rd(h) @ rd(w2).T + b2)
        h = elu(rd(h) @ rd(w3).T + b3)
        return rd(h) @ rd(w4).T + b4

    ref = ref_forward(z, prev_pose)
    assert jnp.allclose(out, ref, atol=2e-3, rtol=2e-3), (out, ref)

    # Batched path: weights stay VMEM-resident across the batch grid,
    # grid has >= 2 parallel steps for v7x's two TensorCores.
    B = 16
    kzb, kpb = jax.random.split(jax.random.PRNGKey(1))
    zs = jax.random.normal(kzb, (B, 32), jnp.float32)
    poses = jax.random.normal(kpb, (B, 62), jnp.float32)
    outs = jax.block_until_ready(gating_network_forward_batch(zs, poses, packed))
    assert outs.shape == (B, 6) and outs.dtype == jnp.float32
    refs = jax.vmap(ref_forward)(zs, poses)
    assert jnp.allclose(outs, refs, atol=2e-3, rtol=2e-3), (outs, refs)

    print("KERNEL_OK")
</pallas_src>

<mosaic_0001>
module attributes {stable_mosaic.version = 11 : i64} {
  func.func @gating_kernel(%arg0: i32, %arg1: memref<8x128xf32, #tpu.memory_space<vmem>>, %arg2: memref<128x256xbf16, #tpu.memory_space<vmem>>, %arg3: memref<1x256xf32, #tpu.memory_space<vmem>>, %arg4: memref<256x256xbf16, #tpu.memory_space<vmem>>, %arg5: memref<1x256xf32, #tpu.memory_space<vmem>>, %arg6: memref<256x256xbf16, #tpu.memory_space<vmem>>, %arg7: memref<1x256xf32, #tpu.memory_space<vmem>>, %arg8: memref<256x128xbf16, #tpu.memory_space<vmem>>, %arg9: memref<1x128xf32, #tpu.memory_space<vmem>>, %arg10: memref<8x128xf32, #tpu.memory_space<vmem>>) attributes {dimension_semantics = [#tpu.dimension_semantics<parallel>], iteration_bounds = array<i64: 1>, scalar_prefetch = 0 : i64, scratch_operands = 0 : i64, tpu.core_type = #tpu.core_type<tc>, window_params = [{transform_indices = @transform_0, window_bounds = array<i64: 8, 128>}, {pipeline_mode = #tpu.pipeline_mode<synchronous>, transform_indices = @transform_1, window_bounds = array<i64: 128, 256>}, {pipeline_mode = #tpu.pipeline_mode<synchronous>, transform_indices = @transform_2, window_bounds = array<i64: 1, 256>}, {pipeline_mode = #tpu.pipeline_mode<synchronous>, transform_indices = @transform_3, window_bounds = array<i64: 256, 256>}, {pipeline_mode = #tpu.pipeline_mode<synchronous>, transform_indices = @transform_4, window_bounds = array<i64: 1, 256>}, {pipeline_mode = #tpu.pipeline_mode<synchronous>, transform_indices = @transform_5, window_bounds = array<i64: 256, 256>}, {pipeline_mode = #tpu.pipeline_mode<synchronous>, transform_indices = @transform_6, window_bounds = array<i64: 1, 256>}, {pipeline_mode = #tpu.pipeline_mode<synchronous>, transform_indices = @transform_7, window_bounds = array<i64: 256, 128>}, {pipeline_mode = #tpu.pipeline_mode<synchronous>, transform_indices = @transform_8, window_bounds = array<i64: 1, 128>}, {transform_indices = @transform_9, window_bounds = array<i64: 8, 128>}]} {
    %c0 = arith.constant 0 : index
    %c0_0 = arith.constant 0 : index
    %0 = vector.load %arg1[%c0, %c0_0] : memref<8x128xf32, #tpu.memory_space<vmem>>, vector<8x128xf32>
    %1 = arith.truncf %0 : vector<8x128xf32> to vector<8x128xbf16>
    %c0_1 = arith.constant 0 : index
    %c0_2 = arith.constant 0 : index
    %2 = vector.load %arg2[%c0_1, %c0_2] : memref<128x256xbf16, #tpu.memory_space<vmem>>, vector<128x256xbf16>
    %cst = arith.constant dense<0.000000e+00> : vector<8x256xf32>
    %3 = tpu.matmul %1, %2, %cst {dimension_numbers = #tpu.dot_dimension_numbers<[1], [0], [0], [1], [0, 0, 1, 1], [], []>} : vector<8x128xbf16>, vector<128x256xbf16>, vector<8x256xf32> -> vector<8x256xf32>
    %c0_3 = arith.constant 0 : index
    %c0_4 = arith.constant 0 : index
    %4 = vector.load %arg3[%c0_3, %c0_4] : memref<1x256xf32, #tpu.memory_space<vmem>>, vector<1x256xf32>
    %5 = vector.broadcast %4 : vector<1x256xf32> to vector<8x256xf32>
    %6 = arith.addf %3, %5 : vector<8x256xf32>
    %cst_5 = arith.constant 0.000000e+00 : f32
    %7 = vector.broadcast %cst_5 : f32 to vector<8x256xf32>
    %8 = arith.cmpf ogt, %6, %7 : vector<8x256xf32>
    %9 = math.exp %6 : vector<8x256xf32>
    %cst_6 = arith.constant 1.000000e+00 : f32
    %10 = vector.broadcast %cst_6 : f32 to vector<8x256xf32>
    %11 = arith.subf %9, %10 : vector<8x256xf32>
    %12 = arith.select %8, %6, %11 : vector<8x256xi1>, vector<8x256xf32>
    %13 = arith.truncf %12 : vector<8x256xf32> to vector<8x256xbf16>
    %c0_7 = arith.constant 0 : index
    %c0_8 = arith.constant 0 : index
    %14 = vector.load %arg4[%c0_7, %c0_8] : memref<256x256xbf16, #tpu.memory_space<vmem>>, vector<256x256xbf16>
    %cst_9 = arith.constant dense<0.000000e+00> : vector<8x256xf32>
    %15 = tpu.matmul %13, %14, %cst_9 {dimension_numbers = #tpu.dot_dimension_numbers<[1], [0], [0], [1], [0, 0, 1, 1], [], []>} : vector<8x256xbf16>, vector<256x256xbf16>, vector<8x256xf32> -> vector<8x256xf32>
    %c0_10 = arith.constant 0 : index
    %c0_11 = arith.constant 0 : index
    %16 = vector.load %arg5[%c0_10, %c0_11] : memref<1x256xf32, #tpu.memory_space<vmem>>, vector<1x256xf32>
    %17 = vector.broadcast %16 : vector<1x256xf32> to vector<8x256xf32>
    %18 = arith.addf %15, %17 : vector<8x256xf32>
    %cst_12 = arith.constant 0.000000e+00 : f32
    %19 = vector.broadcast %cst_12 : f32 to vector<8x256xf32>
    %20 = arith.cmpf ogt, %18, %19 : vector<8x256xf32>
    %21 = math.exp %18 : vector<8x256xf32>
    %cst_13 = arith.constant 1.000000e+00 : f32
    %22 = vector.broadcast %cst_13 : f32 to vector<8x256xf32>
    %23 = arith.subf %21, %22 : vector<8x256xf32>
    %24 = arith.select %20, %18, %23 : vector<8x256xi1>, vector<8x256xf32>
    %25 = arith.truncf %24 : vector<8x256xf32> to vector<8x256xbf16>
    %c0_14 = arith.constant 0 : index
    %c0_15 = arith.constant 0 : index
    %26 = vector.load %arg6[%c0_14, %c0_15] : memref<256x256xbf16, #tpu.memory_space<vmem>>, vector<256x256xbf16>
    %cst_16 = arith.constant dense<0.000000e+00> : vector<8x256xf32>
    %27 = tpu.matmul %25, %26, %cst_16 {dimension_numbers = #tpu.dot_dimension_numbers<[1], [0], [0], [1], [0, 0, 1, 1], [], []>} : vector<8x256xbf16>, vector<256x256xbf16>, vector<8x256xf32> -> vector<8x256xf32>
    %c0_17 = arith.constant 0 : index
    %c0_18 = arith.constant 0 : index
    %28 = vector.load %arg7[%c0_17, %c0_18] : memref<1x256xf32, #tpu.memory_space<vmem>>, vector<1x256xf32>
    %29 = vector.broadcast %28 : vector<1x256xf32> to vector<8x256xf32>
    %30 = arith.addf %27, %29 : vector<8x256xf32>
    %cst_19 = arith.constant 0.000000e+00 : f32
    %31 = vector.broadcast %cst_19 : f32 to vector<8x256xf32>
    %32 = arith.cmpf ogt, %30, %31 : vector<8x256xf32>
    %33 = math.exp %30 : vector<8x256xf32>
    %cst_20 = arith.constant 1.000000e+00 : f32
    %34 = vector.broadcast %cst_20 : f32 to vector<8x256xf32>
    %35 = arith.subf %33, %34 : vector<8x256xf32>
    %36 = arith.select %32, %30, %35 : vector<8x256xi1>, vector<8x256xf32>
    %37 = arith.truncf %36 : vector<8x256xf32> to vector<8x256xbf16>
    %c0_21 = arith.constant 0 : index
    %c0_22 = arith.constant 0 : index
    %38 = vector.load %arg8[%c0_21, %c0_22] : memref<256x128xbf16, #tpu.memory_space<vmem>>, vector<256x128xbf16>
    %cst_23 = arith.constant dense<0.000000e+00> : vector<8x128xf32>
    %39 = tpu.matmul %37, %38, %cst_23 {dimension_numbers = #tpu.dot_dimension_numbers<[1], [0], [0], [1], [0, 0, 1, 1], [], []>} : vector<8x256xbf16>, vector<256x128xbf16>, vector<8x128xf32> -> vector<8x128xf32>
    %c0_24 = arith.constant 0 : index
    %c0_25 = arith.constant 0 : index
    %40 = vector.load %arg9[%c0_24, %c0_25] : memref<1x128xf32, #tpu.memory_space<vmem>>, vector<1x128xf32>
    %41 = vector.broadcast %40 : vector<1x128xf32> to vector<8x128xf32>
    %42 = arith.addf %39, %41 : vector<8x128xf32>
    %c0_26 = arith.constant 0 : index
    %c0_27 = arith.constant 0 : index
    %43 = vector.load %arg10[%c0_26, %c0_27] : memref<8x128xf32, #tpu.memory_space<vmem>>, vector<8x128xf32>
    tpu.vector_store %arg10[%c0_26, %c0_27], %42 {strides = array<i32>} : memref<8x128xf32, #tpu.memory_space<vmem>>, vector<8x128xf32>,
    return
  }
  func.func @transform_0(%arg0: i32) -> (i32, i32) {
    %c0_i32 = arith.constant 0 : i32
    %c0_i32_0 = arith.constant 0 : i32
    return %arg0, %c0_i32 : i32, i32
  }
  func.func @transform_1(%arg0: i32) -> (i32, i32) {
    %c0_i32 = arith.constant 0 : i32
    %c0_i32_0 = arith.constant 0 : i32
    %c0_i32_1 = arith.constant 0 : i32
    return %c0_i32, %c0_i32_0 : i32, i32
  }
  func.func @transform_2(%arg0: i32) -> (i32, i32) {
    %c0_i32 = arith.constant 0 : i32
    %c0_i32_0 = arith.constant 0 : i32
    %c0_i32_1 = arith.constant 0 : i32
    return %c0_i32, %c0_i32_0 : i32, i32
  }
  func.func @transform_3(%arg0: i32) -> (i32, i32) {
    %c0_i32 = arith.constant 0 : i32
    %c0_i32_0 = arith.constant 0 : i32
    %c0_i32_1 = arith.constant 0 : i32
    return %c0_i32, %c0_i32_0 : i32, i32
  }
  func.func @transform_4(%arg0: i32) -> (i32, i32) {
    %c0_i32 = arith.constant 0 : i32
    %c0_i32_0 = arith.constant 0 : i32
    %c0_i32_1 = arith.constant 0 : i32
    return %c0_i32, %c0_i32_0 : i32, i32
  }
  func.func @transform_5(%arg0: i32) -> (i32, i32) {
    %c0_i32 = arith.constant 0 : i32
    %c0_i32_0 = arith.constant 0 : i32
    %c0_i32_1 = arith.constant 0 : i32
    return %c0_i32, %c0_i32_0 : i32, i32
  }
  func.func @transform_6(%arg0: i32) -> (i32, i32) {
    %c0_i32 = arith.constant 0 : i32
    %c0_i32_0 = arith.constant 0 : i32
    %c0_i32_1 = arith.constant 0 : i32
    return %c0_i32, %c0_i32_0 : i32, i32
  }
  func.func @transform_7(%arg0: i32) -> (i32, i32) {
    %c0_i32 = arith.constant 0 : i32
    %c0_i32_0 = arith.constant 0 : i32
    %c0_i32_1 = arith.constant 0 : i32
    return %c0_i32, %c0_i32_0 : i32, i32
  }
  func.func @transform_8(%arg0: i32) -> (i32, i32) {
    %c0_i32 = arith.constant 0 : i32
    %c0_i32_0 = arith.constant 0 : i32
    %c0_i32_1 = arith.constant 0 : i32
    return %c0_i32, %c0_i32_0 : i32, i32
  }
  func.func @transform_9(%arg0: i32) -> (i32, i32) {
    %c0_i32 = arith.constant 0 : i32
    %c0_i32_0 = arith.constant 0 : i32
    return %arg0, %c0_i32 : i32, i32
  }
}

</mosaic_0001>

<llo_original>
// kernel: gating_network_forward.1
$region0: #{gating_network_forward.1}
  #allocation0 [shape = 'u32[]', space=smem, size = 0x4, offset = 0x4, fixed_abs, tag = 'smem constant byte address 0x4 - core index']
  #allocation1 [shape = 'u32[72,128]{1,0:T(1,128)}', space=vmem, size = 0x9000, scoped, tag = 'internal scratch']
  %s0 = inlined_call_operand.vmem [shape: f32[8,128], index: 0, kind: input, shape index: {}]
  %s1 = inlined_call_operand.hbm [shape: bf16[128,256], index: 1, kind: input, shape index: {}]
  %s2 = inlined_call_operand.vmem [shape: f32[1,256], index: 2, kind: input, shape index: {}]
  %s3 = inlined_call_operand.hbm [shape: bf16[256,256], index: 3, kind: input, shape index: {}]
  %s4 = inlined_call_operand.vmem [shape: f32[1,256], index: 4, kind: input, shape index: {}]
  %s5 = inlined_call_operand.hbm [shape: bf16[256,256], index: 5, kind: input, shape index: {}]
  %s6 = inlined_call_operand.vmem [shape: f32[1,256], index: 6, kind: input, shape index: {}]
  %s7 = inlined_call_operand.hbm [shape: bf16[256,128], index: 7, kind: input, shape index: {}]
  %s8 = inlined_call_operand.vmem [shape: f32[1,128], index: 8, kind: input, shape index: {}]
  %s9 = inlined_call_operand.vmem [shape: f32[8,128], index: 9, kind: output, shape index: {}]
  %s10 = sld [smem:[#allocation0]]
  $region62: #{gating_network_forward.1} parent=0
    _
  %s12 = ssub.s32 1, %s10
  %s13 = scalar_select 0, %s12, %s10
  $region1: #{gating_network_forward.1} parent=0
    #allocation2 [shape = 'u8[65536]{0}', space=vmem, size = 0x10000, scoped, tag = 'input window, operand 1, single buffered']
    #allocation3 [shape = 's32[1]{0}', space=sflag, size = 0x4, scoped, tag = 'scoped memory for gating_network_forward.1']
    #allocation4 [shape = 'u8[131072]{0}', space=vmem, size = 0x20000, scoped, tag = 'input window, operand 3, single buffered']
    #allocation5 [shape = 's32[1]{0}', space=sflag, size = 0x4, scoped, tag = 'scoped memory for gating_network_forward.1']
    #allocation6 [shape = 'u8[131072]{0}', space=vmem, size = 0x20000, scoped, tag = 'input window, operand 5, single buffered']
    #allocation7 [shape = 'u8[65536]{0}', space=vmem, size = 0x10000, scoped, tag = 'input window, operand 7, single buffered']
    #allocation8 [shape = 's32[1]{0}', space=sflag, size = 0x4, scoped, tag = 'scoped memory for gating_network_forward.1']
    %14 = vsyncpa [#allocation3], 0
    %15 = vsyncpa [#allocation5], 0
    %16 = vsyncpa [#allocation8], 0
    // Predicated region
    $region2: #{gating_network_forward.1} parent=1 // pred_check
      _
    $region3: #{gating_network_forward.1} parent=1 // pred_check_branch
      %18 = sbr.rel (0) target = $region5
    $region4: #{gating_network_forward.1} parent=1 // pred_region
      _
    $region5: #{gating_network_forward.1} parent=1 // pred_fallthru
      _
    // Predicated region
    $region6: #{gating_network_forward.1} parent=1 // pred_check
      _
    $region7: #{gating_network_forward.1} parent=1 // pred_check_branch
      %20 = sbr.rel (0) target = $region9
    $region8: #{gating_network_forward.1} parent=1 // pred_region
      %22 = vsyncadd [#allocation3], 0
      %s23 = sshll.u32 %s1, 4
      %s24 = int_to_ptr.hbm [resolvable:$true] %s23
      %s25 = sshll.u32 [#allocation2], 4
      %s26 = int_to_ptr.vmem [resolvable:$true] %s25
      %31 = dma.hbm_to_vmem [thread:$0]  %s24, 2048, %s26, [#allocation3], 128, 128, 8
    $region9: #{gating_network_forward.1} parent=1 // pred_fallthru
      _
    // Predicated region
    $region10: #{gating_network_forward.1} parent=1 // pred_check
      _
    $region11: #{gating_network_forward.1} parent=1 // pred_check_branch
      %33 = sbr.rel (0) target = $region13
    $region12: #{gating_network_forward.1} parent=1 // pred_region
      _
    $region13: #{gating_network_forward.1} parent=1 // pred_fallthru
      _
    // Predicated region
    $region14: #{gating_network_forward.1} parent=1 // pred_check
      _
    $region15: #{gating_network_forward.1} parent=1 // pred_check_branch
      %35 = sbr.rel (0) target = $region17
    $region16: #{gating_network_forward.1} parent=1 // pred_region
      %37 = vsyncadd [#allocation5], 0
      %s38 = sshll.u32 %s3, 4
      %s39 = int_to_ptr.hbm [resolvable:$true] %s38
      %s40 = sshll.u32 [#allocation4], 4
      %s41 = int_to_ptr.vmem [resolvable:$true] %s40
      %46 = dma.hbm_to_vmem [thread:$0]  %s39, 4096, %s41, [#allocation5], 128, 128, 8
    $region17: #{gating_network_forward.1} parent=1 // pred_fallthru
      _
    // Predicated region
    $region18: #{gating_network_forward.1} parent=1 // pred_check
      _
    $region19: #{gating_network_forward.1} parent=1 // pred_check_branch
      %48 = sbr.rel (0) target = $region21
    $region20: #{gating_network_forward.1} parent=1 // pred_region
      _
    $region21: #{gating_network_forward.1} parent=1 // pred_fallthru
      _
    // Predicated region
    $region22: #{gating_network_forward.1} parent=1 // pred_check
      _
    $region23: #{gating_network_forward.1} parent=1 // pred_check_branch
      %50 = sbr.rel (0) target = $region25
    $region24: #{gating_network_forward.1} parent=1 // pred_region
      %52 = vsyncadd [#allocation5], 0
      %s53 = sshll.u32 %s5, 4
      %s54 = int_to_ptr.hbm [resolvable:$true] %s53
      %s55 = sshll.u32 [#allocation6], 4
      %s56 = int_to_ptr.vmem [resolvable:$true] %s55
      %61 = dma.hbm_to_vmem [thread:$0]  %s54, 4096, %s56, [#allocation5], 128, 128, 8
    $region25: #{gating_network_forward.1} parent=1 // pred_fallthru
      _
    // Predicated region
    $region26: #{gating_network_forward.1} parent=1 // pred_check
      _
    $region27: #{gating_network_forward.1} parent=1 // pred_check_branch
      %63 = sbr.rel (0) target = $region29
    $region28: #{gating_network_forward.1} parent=1 // pred_region
      _
    $region29: #{gating_network_forward.1} parent=1 // pred_fallthru
      _
    // Predicated region
    $region30: #{gating_network_forward.1} parent=1 // pred_check
      _
    $region31: #{gating_network_forward.1} parent=1 // pred_check_branch
      %65 = sbr.rel (0) target = $region33
    $region32: #{gating_network_forward.1} parent=1 // pred_region
      %67 = vsyncadd [#allocation8], 0
      %s68 = sshll.u32 %s7, 4
      %s69 = int_to_ptr.hbm [resolvable:$true] %s68
      %s70 = sshll.u32 [#allocation7], 4
      %s71 = int_to_ptr.vmem [resolvable:$true] %s70
      %76 = dma.hbm_to_vmem [thread:$0]  %s69, 2048, %s71, [#allocation8], 64, 64, 4
    $region33: #{gating_network_forward.1} parent=1 // pred_fallthru
      _
    // Predicated region
    $region34: #{gating_network_forward.1} parent=1 // pred_check
      _
    $region35: #{gating_network_forward.1} parent=1 // pred_check_branch
      %78 = sbr.rel (0) target = $region37
    $region36: #{gating_network_forward.1} parent=1 // pred_region
      _
    $region37: #{gating_network_forward.1} parent=1 // pred_fallthru
      _
    // Predicated region
    $region38: #{gating_network_forward.1} parent=1 // pred_check
      _
    $region39: #{gating_network_forward.1} parent=1 // pred_check_branch
      %80 = sbr.rel (0) target = $region41
    $region40: #{gating_network_forward.1} parent=1 // pred_region
      %82 = dma.done [#allocation3], 2048
    $region41: #{gating_network_forward.1} parent=1 // pred_fallthru
      _
    // Predicated region
    $region42: #{gating_network_forward.1} parent=1 // pred_check
      _
    $region43: #{gating_network_forward.1} parent=1 // pred_check_branch
      %84 = sbr.rel (0) target = $region45
    $region44: #{gating_network_forward.1} parent=1 // pred_region
      %86 = dma.done [#allocation5], 4096
    $region45: #{gating_network_forward.1} parent=1 // pred_fallthru
      _
    // Predicated region
    $region46: #{gating_network_forward.1} parent=1 // pred_check
      _
    $region47: #{gating_network_forward.1} parent=1 // pred_check_branch
      %88 = sbr.rel (0) target = $region49
    $region48: #{gating_network_forward.1} parent=1 // pred_region
      %90 = dma.done [#allocation5], 4096
    $region49: #{gating_network_forward.1} parent=1 // pred_fallthru
      _
    // Predicated region
    $region50: #{gating_network_forward.1} parent=1 // pred_check
      _
    $region51: #{gating_network_forward.1} parent=1 // pred_check_branch
      %92 = sbr.rel (0) target = $region53
    $region52: #{gating_network_forward.1} parent=1 // pred_region
      %94 = dma.done [#allocation8], 2048
    $region53: #{gating_network_forward.1} parent=1 // pred_fallthru
      _
    %v95 = vld [vmem:[%s0] sm:$0xff]
    %v96 = vpack.c.bf16 %v95, %v95
    %v97 = vld [vmem:[#allocation2] sm:$0xff]
    %v98 = vld [vmem:[#allocation2 + $0x8] sm:$0xff]
    %v99 = vld [vmem:[#allocation2 + $0x10] sm:$0xff]
    %v100 = vld [vmem:[#allocation2 + $0x18] sm:$0xff]
    %v101 = vld [vmem:[#allocation2 + $0x20] sm:$0xff]
    %v102 = vld [vmem:[#allocation2 + $0x28] sm:$0xff]
    %v103 = vld [vmem:[#allocation2 + $0x30] sm:$0xff]
    %v104 = vld [vmem:[#allocation2 + $0x38] sm:$0xff]
    %v105 = vld [vmem:[#allocation2 + $0x40] sm:$0xff]
    %v106 = vld [vmem:[#allocation2 + $0x48] sm:$0xff]
    %v107 = vld [vmem:[#allocation2 + $0x50] sm:$0xff]
    %v108 = vld [vmem:[#allocation2 + $0x58] sm:$0xff]
    %v109 = vld [vmem:[#allocation2 + $0x60] sm:$0xff]
    %v110 = vld [vmem:[#allocation2 + $0x68] sm:$0xff]
    %v111 = vld [vmem:[#allocation2 + $0x70] sm:$0xff]
    %v112 = vld [vmem:[#allocation2 + $0x78] sm:$0xff]
    %v113 = vld [vmem:[%s2] sm:$0x3]
    %v115 = vperm.slane %v113, 0
    %v116 = vperm.slane %v113, 1
    %v135 = vunpack.c.l.b16 %v97
    %v136 = vunpack.c.h.b16 %v97
    %v137 = vunpack.c.l.b16 %v98
    %v138 = vunpack.c.h.b16 %v98
    %v139 = vunpack.c.l.b16 %v99
    %v140 = vunpack.c.h.b16 %v99
    %v141 = vunpack.c.l.b16 %v100
    %v142 = vunpack.c.h.b16 %v100
    %v143 = vunpack.c.l.b16 %v101
    %v144 = vunpack.c.h.b16 %v101
    %v145 = vunpack.c.l.b16 %v102
    %v146 = vunpack.c.h.b16 %v102
    %v147 = vunpack.c.l.b16 %v103
    %v148 = vunpack.c.h.b16 %v103
    %v149 = vunpack.c.l.b16 %v104
    %v150 = vunpack.c.h.b16 %v104
    %v151 = vunpack.c.l.b16 %v105
    %v152 = vunpack.c.h.b16 %v105
    %v153 = vunpack.c.l.b16 %v106
    %v154 = vunpack.c.h.b16 %v106
    %v155 = vunpack.c.l.b16 %v107
    %v156 = vunpack.c.h.b16 %v107
    %v157 = vunpack.c.l.b16 %v108
    %v158 = vunpack.c.h.b16 %v108
    %v159 = vunpack.c.l.b16 %v109
    %v160 = vunpack.c.h.b16 %v109
    %v161 = vunpack.c.l.b16 %v110
    %v162 = vunpack.c.h.b16 %v110
    %v163 = vunpack.c.l.b16 %v111
    %v164 = vunpack.c.h.b16 %v111
    %v165 = vunpack.c.l.b16 %v112
    %v166 = vunpack.c.h.b16 %v112
    %v167 = vpack.c.b16 %v137, %v135
    %v168 = vpack.c.b16 %v138, %v136
    %v169 = vpack.c.b16 %v141, %v139
    %v170 = vpack.c.b16 %v142, %v140
    %v171 = vpack.c.b16 %v145, %v143
    %v172 = vpack.c.b16 %v146, %v144
    %v173 = vpack.c.b16 %v149, %v147
    %v174 = vpack.c.b16 %v150, %v148
    %v175 = vpack.c.b16 %v153, %v151
    %v176 = vpack.c.b16 %v154, %v152
    %v177 = vpack.c.b16 %v157, %v155
    %v178 = vpack.c.b16 %v158, %v156
    %v179 = vpack.c.b16 %v161, %v159
    %v180 = vpack.c.b16 %v162, %v160
    %v181 = vpack.c.b16 %v165, %v163
    %v182 = vpack.c.b16 %v166, %v164
    %199 = vmatpush.bf16.msra.mxu0 %v181
    %200 = vmatpush.bf16.msra.mxu0 %v179
    %201 = vmatpush.bf16.msra.mxu0 %v177
    %202 = vmatpush.bf16.msra.mxu0 %v175
    %203 = vmatpush.bf16.msra.mxu0 %v173
    %204 = vmatpush.bf16.msra.mxu0 %v171
    %205 = vmatpush.bf16.msra.mxu0 %v169
    %206 = vmatpush.bf16.msra.mxu0 %v167
    %207 = vmatmul.bf16.gmra.mxu0 %v96
    %v208 = vpop.f32.mrf.mxu0
    %v209 = vadd.f32 %v115, %v208
    %v210 = vpop.f32.mrf.mxu0
    %211 = vdwg.mxu0
    %212 = vmatpush.bf16.msra.mxu0 %v182
    %213 = vmatpush.bf16.msra.mxu0 %v180
    %214 = vmatpush.bf16.msra.mxu0 %v178
    %215 = vmatpush.bf16.msra.mxu0 %v176
    %216 = vmatpush.bf16.msra.mxu0 %v174
    %217 = vmatpush.bf16.msra.mxu0 %v172
    %218 = vmatpush.bf16.msra.mxu0 %v170
    %219 = vmatpush.bf16.msra.mxu0 %v168
    %220 = vmatmul.bf16.gmra.mxu0 %v96
    %v221 = vpop.f32.mrf.mxu0
    %v222 = vadd.f32 %v116, %v221
    %v223 = vpop.f32.mrf.mxu0
    %224 = vdwg.mxu0
    %vm225 = vcmp.gt.f32.partialorder %v209, 0.0
    %vm226 = vcmp.gt.f32.partialorder %v222, 0.0
    %v227 = vmul.f32 %v209, 1.442695
    %v228 = vpow.pop %v227
    %v229 = vmul.f32 %v222, 1.442695
    %v230 = vpow.pop %v229
    %v231 = vsub.f32 %v228, 1.0
    %v232 = vsub.f32 %v230, 1.0
    %v233 = vsel %vm225, %v209, %v231
    %v234 = vsel %vm226, %v222, %v232
    %v235 = vpack.c.bf16 %v233, %v233
    %v236 = vpack.c.bf16 %v234, %v234
    %v237 = vld [vmem:[#allocation4] sm:$0xff]
    %v238 = vld [vmem:[#allocation4 + $0x8] sm:$0xff]
    %v239 = vld [vmem:[#allocation4 + $0x10] sm:$0xff]
    %v240 = vld [vmem:[#allocation4 + $0x18] sm:$0xff]
    %v241 = vld [vmem:[#allocation4 + $0x20] sm:$0xff]
    %v242 = vld [vmem:[#allocation4 + $0x28] sm:$0xff]
    %v243 = vld [vmem:[#allocation4 + $0x30] sm:$0xff]
    %v244 = vld [vmem:[#allocation4 + $0x38] sm:$0xff]
    %v245 = vld [vmem:[#allocation4 + $0x40] sm:$0xff]
    %v246 = vld [vmem:[#allocation4 + $0x48] sm:$0xff]
    %v247 = vld [vmem:[#allocation4 + $0x50] sm:$0xff]
    %v248 = vld [vmem:[#allocation4 + $0x58] sm:$0xff]
    %v249 = vld [vmem:[#allocation4 + $0x60] sm:$0xff]
    %v250 = vld [vmem:[#allocation4 + $0x68] sm:$0xff]
    %v251 = vld [vmem:[#allocation4 + $0x70] sm:$0xff]
    %v252 = vld [vmem:[#allocation4 + $0x78] sm:$0xff]
    %v253 = vld [vmem:[#allocation4 + $0x80] sm:$0xff]
    %v254 = vld [vmem:[#allocation4 + $0x88] sm:$0xff]
    %v255 = vld [vmem:[#allocation4 + $0x90] sm:$0xff]
    %v256 = vld [vmem:[#allocation4 + $0x98] sm:$0xff]
    %v257 = vld [vmem:[#allocation4 + $0xa0] sm:$0xff]
    %v258 = vld [vmem:[#allocation4 + $0xa8] sm:$0xff]
    %v259 = vld [vmem:[#allocation4 + $0xb0] sm:$0xff]
    %v260 = vld [vmem:[#allocation4 + $0xb8] sm:$0xff]
    %v261 = vld [vmem:[#allocation4 + $0xc0] sm:$0xff]
    %v262 = vld [vmem:[#allocation4 + $0xc8] sm:$0xff]
    %v263 = vld [vmem:[#allocation4 + $0xd0] sm:$0xff]
    %v264 = vld [vmem:[#allocation4 + $0xd8] sm:$0xff]
    %v265 = vld [vmem:[#allocation4 + $0xe0] sm:$0xff]
    %v266 = vld [vmem:[#allocation4 + $0xe8] sm:$0xff]
    %v267 = vld [vmem:[#allocation4 + $0xf0] sm:$0xff]
    %v268 = vld [vmem:[#allocation4 + $0xf8] sm:$0xff]
    %v269 = vld [vmem:[%s4] sm:$0x3]
    %v271 = vperm.slane %v269, 0
    %v272 = vperm.slane %v269, 1
    %v307 = vunpack.c.l.b16 %v237
    %v308 = vunpack.c.h.b16 %v237
    %v309 = vunpack.c.l.b16 %v238
    %v310 = vunpack.c.h.b16 %v238
    %v311 = vunpack.c.l.b16 %v239
    %v312 = vunpack.c.h.b16 %v239
    %v313 = vunpack.c.l.b16 %v240
    %v314 = vunpack.c.h.b16 %v240
    %v315 = vunpack.c.l.b16 %v241
    %v316 = vunpack.c.h.b16 %v241
    %v317 = vunpack.c.l.b16 %v242
    %v318 = vunpack.c.h.b16 %v242
    %v319 = vunpack.c.l.b16 %v243
    %v320 = vunpack.c.h.b16 %v243
    %v321 = vunpack.c.l.b16 %v244
    %v322 = vunpack.c.h.b16 %v244
    %v323 = vunpack.c.l.b16 %v245
    %v324 = vunpack.c.h.b16 %v245
    %v325 = vunpack.c.l.b16 %v246
    %v326 = vunpack.c.h.b16 %v246
    %v327 = vunpack.c.l.b16 %v247
    %v328 = vunpack.c.h.b16 %v247
    %v329 = vunpack.c.l.b16 %v248
    %v330 = vunpack.c.h.b16 %v248
    %v331 = vunpack.c.l.b16 %v249
    %v332 = vunpack.c.h.b16 %v249
    %v333 = vunpack.c.l.b16 %v250
    %v334 = vunpack.c.h.b16 %v250
    %v335 = vunpack.c.l.b16 %v251
    %v336 = vunpack.c.h.b16 %v251
    %v337 = vunpack.c.l.b16 %v252
    %v338 = vunpack.c.h.b16 %v252
    %v339 = vunpack.c.l.b16 %v253
    %v340 = vunpack.c.h.b16 %v253
    %v341 = vunpack.c.l.b16 %v254
    %v342 = vunpack.c.h.b16 %v254
    %v343 = vunpack.c.l.b16 %v255
    %v344 = vunpack.c.h.b16 %v255
    %v345 = vunpack.c.l.b16 %v256
    %v346 = vunpack.c.h.b16 %v256
    %v347 = vunpack.c.l.b16 %v257
    %v348 = vunpack.c.h.b16 %v257
    %v349 = vunpack.c.l.b16 %v258
    %v350 = vunpack.c.h.b16 %v258
    %v351 = vunpack.c.l.b16 %v259
    %v352 = vunpack.c.h.b16 %v259
    %v353 = vunpack.c.l.b16 %v260
    %v354 = vunpack.c.h.b16 %v260
    %v355 = vunpack.c.l.b16 %v261
    %v356 = vunpack.c.h.b16 %v261
    %v357 = vunpack.c.l.b16 %v262
    %v358 = vunpack.c.h.b16 %v262
    %v359 = vunpack.c.l.b16 %v263
    %v360 = vunpack.c.h.b16 %v263
    %v361 = vunpack.c.l.b16 %v264
    %v362 = vunpack.c.h.b16 %v264
    %v363 = vunpack.c.l.b16 %v265
    %v364 = vunpack.c.h.b16 %v265
    %v365 = vunpack.c.l.b16 %v266
    %v366 = vunpack.c.h.b16 %v266
    %v367 = vunpack.c.l.b16 %v267
    %v368 = vunpack.c.h.b16 %v267
    %v369 = vunpack.c.l.b16 %v268
    %v370 = vunpack.c.h.b16 %v268
    %v371 = vpack.c.b16 %v309, %v307
    %v372 = vpack.c.b16 %v310, %v308
    %v373 = vpack.c.b16 %v313, %v311
    %v374 = vpack.c.b16 %v314, %v312
    %v375 = vpack.c.b16 %v317, %v315
    %v376 = vpack.c.b16 %v318, %v316
    %v377 = vpack.c.b16 %v321, %v319
    %v378 = vpack.c.b16 %v322, %v320
    %v379 = vpack.c.b16 %v325, %v323
    %v380 = vpack.c.b16 %v326, %v324
    %v381 = vpack.c.b16 %v329, %v327
    %v382 = vpack.c.b16 %v330, %v328
    %v383 = vpack.c.b16 %v333, %v331
    %v384 = vpack.c.b16 %v334, %v332
    %v385 = vpack.c.b16 %v337, %v335
    %v386 = vpack.c.b16 %v338, %v336
    %v387 = vpack.c.b16 %v341, %v339
    %v388 = vpack.c.b16 %v342, %v340
    %v389 = vpack.c.b16 %v345, %v343
    %v390 = vpack.c.b16 %v346, %v344
    %v391 = vpack.c.b16 %v349, %v347
    %v392 = vpack.c.b16 %v350, %v348
    %v393 = vpack.c.b16 %v353, %v351
    %v394 = vpack.c.b16 %v354, %v352
    %v395 = vpack.c.b16 %v357, %v355
    %v396 = vpack.c.b16 %v358, %v356
    %v397 = vpack.c.b16 %v361, %v359
    %v398 = vpack.c.b16 %v362, %v360
    %v399 = vpack.c.b16 %v365, %v363
    %v400 = vpack.c.b16 %v366, %v364
    %v401 = vpack.c.b16 %v369, %v367
    %v402 = vpack.c.b16 %v370, %v368
    %435 = vmatpush.bf16.msra.mxu0 %v385
    %436 = vmatpush.bf16.msra.mxu0 %v383
    %437 = vmatpush.bf16.msra.mxu0 %v381
    %438 = vmatpush.bf16.msra.mxu0 %v379
    %439 = vmatpush.bf16.msra.mxu0 %v377
    %440 = vmatpush.bf16.msra.mxu0 %v375
    %441 = vmatpush.bf16.msra.mxu0 %v373
    %442 = vmatpush.bf16.msra.mxu0 %v371
    %443 = vmatmul.bf16.gmra.mxu0 %v235
    %v444 = vpop.f32.mrf.mxu0
    %v445 = vadd.f32 %v271, %v444
    %v446 = vpop.f32.mrf.mxu0
    %447 = vdwg.mxu0
    %448 = vmatpush.bf16.msra.mxu0 %v401
    %449 = vmatpush.bf16.msra.mxu0 %v399
    %450 = vmatpush.bf16.msra.mxu0 %v397
    %451 = vmatpush.bf16.msra.mxu0 %v395
    %452 = vmatpush.bf16.msra.mxu0 %v393
    %453 = vmatpush.bf16.msra.mxu0 %v391
    %454 = vmatpush.bf16.msra.mxu0 %v389
    %455 = vmatpush.bf16.msra.mxu0 %v387
    %456 = vmatmul.bf16.gmra.mxu0 %v236
    %v457 = vpop.f32.mrf.mxu0
    %v458 = vadd.f32 %v445, %v457
    %v459 = vpop.f32.mrf.mxu0
    %460 = vdwg.mxu0
    %461 = vmatpush.bf16.msra.mxu0 %v386
    %462 = vmatpush.bf16.msra.mxu0 %v384
    %463 = vmatpush.bf16.msra.mxu0 %v382
    %464 = vmatpush.bf16.msra.mxu0 %v380
    %465 = vmatpush.bf16.msra.mxu0 %v378
    %466 = vmatpush.bf16.msra.mxu0 %v376
    %467 = vmatpush.bf16.msra.mxu0 %v374
    %468 = vmatpush.bf16.msra.mxu0 %v372
    %469 = vmatmul.bf16.gmra.mxu0 %v235
    %v470 = vpop.f32.mrf.mxu0
    %v471 = vadd.f32 %v272, %v470
    %v472 = vpop.f32.mrf.mxu0
    %473 = vdwg.mxu0
    %474 = vmatpush.bf16.msra.mxu0 %v402
    %475 = vmatpush.bf16.msra.mxu0 %v400
    %476 = vmatpush.bf16.msra.mxu0 %v398
    %477 = vmatpush.bf16.msra.mxu0 %v396
    %478 = vmatpush.bf16.msra.mxu0 %v394
    %479 = vmatpush.bf16.msra.mxu0 %v392
    %480 = vmatpush.bf16.msra.mxu0 %v390
    %481 = vmatpush.bf16.msra.mxu0 %v388
    %482 = vmatmul.bf16.gmra.mxu0 %v236
    %v483 = vpop.f32.mrf.mxu0
    %v484 = vadd.f32 %v471, %v483
    %v485 = vpop.f32.mrf.mxu0
    %486 = vdwg.mxu0
    %vm487 = vcmp.gt.f32.partialorder %v458, 0.0
    %vm488 = vcmp.gt.f32.partialorder %v484, 0.0
    %v489 = vmul.f32 %v458, 1.442695
    %v490 = vpow.pop %v489
    %v491 = vmul.f32 %v484, 1.442695
    %v492 = vpow.pop %v491
    %v493 = vsub.f32 %v490, 1.0
    %v494 = vsub.f32 %v492, 1.0
    %v495 = vsel %vm487, %v458, %v493
    %v496 = vsel %vm488, %v484, %v494
    %v497 = vpack.c.bf16 %v495, %v495
    %v498 = vpack.c.bf16 %v496, %v496
    %v499 = vld [vmem:[#allocation6] sm:$0xff]
    %v500 = vld [vmem:[#allocation6 + $0x8] sm:$0xff]
    %v501 = vld [vmem:[#allocation6 + $0x10] sm:$0xff]
    %v502 = vld [vmem:[#allocation6 + $0x18] sm:$0xff]
    %v503 = vld [vmem:[#allocation6 + $0x20] sm:$0xff]
    %v504 = vld [vmem:[#allocation6 + $0x28] sm:$0xff]
    %v505 = vld [vmem:[#allocation6 + $0x30] sm:$0xff]
    %v506 = vld [vmem:[#allocation6 + $0x38] sm:$0xff]
    %v507 = vld [vmem:[#allocation6 + $0x40] sm:$0xff]
    %v508 = vld [vmem:[#allocation6 + $0x48] sm:$0xff]
    %v509 = vld [vmem:[#allocation6 + $0x50] sm:$0xff]
    %v510 = vld [vmem:[#allocation6 + $0x58] sm:$0xff]
    %v511 = vld [vmem:[#allocation6 + $0x60] sm:$0xff]
    %v512 = vld [vmem:[#allocation6 + $0x68] sm:$0xff]
    %v513 = vld [vmem:[#allocation6 + $0x70] sm:$0xff]
    %v514 = vld [vmem:[#allocation6 + $0x78] sm:$0xff]
    %v515 = vld [vmem:[#allocation6 + $0x80] sm:$0xff]
    %v516 = vld [vmem:[#allocation6 + $0x88] sm:$0xff]
    %v517 = vld [vmem:[#allocation6 + $0x90] sm:$0xff]
    %v518 = vld [vmem:[#allocation6 + $0x98] sm:$0xff]
    %v519 = vld [vmem:[#allocation6 + $0xa0] sm:$0xff]
    %v520 = vld [vmem:[#allocation6 + $0xa8] sm:$0xff]
    %v521 = vld [vmem:[#allocation6 + $0xb0] sm:$0xff]
    %v522 = vld [vmem:[#allocation6 + $0xb8] sm:$0xff]
    %v523 = vld [vmem:[#allocation6 + $0xc0] sm:$0xff]
    %v524 = vld [vmem:[#allocation6 + $0xc8] sm:$0xff]
    %v525 = vld [vmem:[#allocation6 + $0xd0] sm:$0xff]
    %v526 = vld [vmem:[#allocation6 + $0xd8] sm:$0xff]
    %v527 = vld [vmem:[#allocation6 + $0xe0] sm:$0xff]
    %v528 = vld [vmem:[#allocation6 + $0xe8] sm:$0xff]
    %v529 = vld [vmem:[#allocation6 + $0xf0] sm:$0xff]
    %v530 = vld [vmem:[#allocation6 + $0xf8] sm:$0xff]
    %v531 = vld [vmem:[%s6] sm:$0x3]
    %v533 = vperm.slane %v531, 0
    %v534 = vperm.slane %v531, 1
    %v569 = vunpack.c.l.b16 %v499
    %v570 = vunpack.c.h.b16 %v499
    %v571 = vunpack.c.l.b16 %v500
    %v572 = vunpack.c.h.b16 %v500
    %v573 = vunpack.c.l.b16 %v501
    %v574 = vunpack.c.h.b16 %v501
    %v575 = vunpack.c.l.b16 %v502
    %v576 = vunpack.c.h.b16 %v502
    %v577 = vunpack.c.l.b16 %v503
    %v578 = vunpack.c.h.b16 %v503
    %v579 = vunpack.c.l.b16 %v504
    %v580 = vunpack.c.h.b16 %v504
    %v581 = vunpack.c.l.b16 %v505
    %v582 = vunpack.c.h.b16 %v505
    %v583 = vunpack.c.l.b16 %v506
    %v584 = vunpack.c.h.b16 %v506
    %v585 = vunpack.c.l.b16 %v507
    %v586 = vunpack.c.h.b16 %v507
    %v587 = vunpack.c.l.b16 %v508
    %v588 = vunpack.c.h.b16 %v508
    %v589 = vunpack.c.l.b16 %v509
    %v590 = vunpack.c.h.b16 %v509
    %v591 = vunpack.c.l.b16 %v510
    %v592 = vunpack.c.h.b16 %v510
    %v593 = vunpack.c.l.b16 %v511
    %v594 = vunpack.c.h.b16 %v511
    %v595 = vunpack.c.l.b16 %v512
    %v596 = vunpack.c.h.b16 %v512
    %v597 = vunpack.c.l.b16 %v513
    %v598 = vunpack.c.h.b16 %v513
    %v599 = vunpack.c.l.b16 %v514
    %v600 = vunpack.c.h.b16 %v514
    %v601 = vunpack.c.l.b16 %v515
    %v602 = vunpack.c.h.b16 %v515
    %v603 = vunpack.c.l.b16 %v516
    %v604 = vunpack.c.h.b16 %v516
    %v605 = vunpack.c.l.b16 %v517
    %v606 = vunpack.c.h.b16 %v517
    %v607 = vunpack.c.l.b16 %v518
    %v608 = vunpack.c.h.b16 %v518
    %v609 = vunpack.c.l.b16 %v519
    %v610 = vunpack.c.h.b16 %v519
    %v611 = vunpack.c.l.b16 %v520
    %v612 = vunpack.c.h.b16 %v520
    %v613 = vunpack.c.l.b16 %v521
    %v614 = vunpack.c.h.b16 %v521
    %v615 = vunpack.c.l.b16 %v522
    %v616 = vunpack.c.h.b16 %v522
    %v617 = vunpack.c.l.b16 %v523
    %v618 = vunpack.c.h.b16 %v523
    %v619 = vunpack.c.l.b16 %v524
    %v620 = vunpack.c.h.b16 %v524
    %v621 = vunpack.c.l.b16 %v525
    %v622 = vunpack.c.h.b16 %v525
    %v623 = vunpack.c.l.b16 %v526
    %v624 = vunpack.c.h.b16 %v526
    %v625 = vunpack.c.l.b16 %v527
    %v626 = vunpack.c.h.b16 %v527
    %v627 = vunpack.c.l.b16 %v528
    %v628 = vunpack.c.h.b16 %v528
    %v629 = vunpack.c.l.b16 %v529
    %v630 = vunpack.c.h.b16 %v529
    %v631 = vunpack.c.l.b16 %v530
    %v632 = vunpack.c.h.b16 %v530
    %v633 = vpack.c.b16 %v571, %v569
    %v634 = vpack.c.b16 %v572, %v570
    %v635 = vpack.c.b16 %v575, %v573
    %v636 = vpack.c.b16 %v576, %v574
    %v637 = vpack.c.b16 %v579, %v577
    %v638 = vpack.c.b16 %v580, %v578
    %v639 = vpack.c.b16 %v583, %v581
    %v640 = vpack.c.b16 %v584, %v582
    %v641 = vpack.c.b16 %v587, %v585
    %v642 = vpack.c.b16 %v588, %v586
    %v643 = vpack.c.b16 %v591, %v589
    %v644 = vpack.c.b16 %v592, %v590
    %v645 = vpack.c.b16 %v595, %v593
    %v646 = vpack.c.b16 %v596, %v594
    %v647 = vpack.c.b16 %v599, %v597
    %v648 = vpack.c.b16 %v600, %v598
    %v649 = vpack.c.b16 %v603, %v601
    %v650 = vpack.c.b16 %v604, %v602
    %v651 = vpack.c.b16 %v607, %v605
    %v652 = vpack.c.b16 %v608, %v606
    %v653 = vpack.c.b16 %v611, %v609
    %v654 = vpack.c.b16 %v612, %v610
    %v655 = vpack.c.b16 %v615, %v613
    %v656 = vpack.c.b16 %v616, %v614
    %v657 = vpack.c.b16 %v619, %v617
    %v658 = vpack.c.b16 %v620, %v618
    %v659 = vpack.c.b16 %v623, %v621
    %v660 = vpack.c.b16 %v624, %v622
    %v661 = vpack.c.b16 %v627, %v625
    %v662 = vpack.c.b16 %v628, %v626
    %v663 = vpack.c.b16 %v631, %v629
    %v664 = vpack.c.b16 %v632, %v630
    %697 = vmatpush.bf16.msra.mxu0 %v647
    %698 = vmatpush.bf16.msra.mxu0 %v645
    %699 = vmatpush.bf16.msra.mxu0 %v643
    %700 = vmatpush.bf16.msra.mxu0 %v641
    %701 = vmatpush.bf16.msra.mxu0 %v639
    %702 = vmatpush.bf16.msra.mxu0 %v637
    %703 = vmatpush.bf16.msra.mxu0 %v635
    %704 = vmatpush.bf16.msra.mxu0 %v633
    %705 = vmatmul.bf16.gmra.mxu0 %v497
    %v706 = vpop.f32.mrf.mxu0
    %v707 = vadd.f32 %v533, %v706
    %v708 = vpop.f32.mrf.mxu0
    %709 = vdwg.mxu0
    %710 = vmatpush.bf16.msra.mxu0 %v663
    %711 = vmatpush.bf16.msra.mxu0 %v661
    %712 = vmatpush.bf16.msra.mxu0 %v659
    %713 = vmatpush.bf16.msra.mxu0 %v657
    %714 = vmatpush.bf16.msra.mxu0 %v655
    %715 = vmatpush.bf16.msra.mxu0 %v653
    %716 = vmatpush.bf16.msra.mxu0 %v651
    %717 = vmatpush.bf16.msra.mxu0 %v649
    %718 = vmatmul.bf16.gmra.mxu0 %v498
    %v719 = vpop.f32.mrf.mxu0
    %v720 = vadd.f32 %v707, %v719
    %v721 = vpop.f32.mrf.mxu0
    %722 = vdwg.mxu0
    %723 = vmatpush.bf16.msra.mxu0 %v648
    %724 = vmatpush.bf16.msra.mxu0 %v646
    %725 = vmatpush.bf16.msra.mxu0 %v644
    %726 = vmatpush.bf16.msra.mxu0 %v642
    %727 = vmatpush.bf16.msra.mxu0 %v640
    %728 = vmatpush.bf16.msra.mxu0 %v638
    %729 = vmatpush.bf16.msra.mxu0 %v636
    %730 = vmatpush.bf16.msra.mxu0 %v634
    %731 = vmatmul.bf16.gmra.mxu0 %v497
    %v732 = vpop.f32.mrf.mxu0
    %v733 = vadd.f32 %v534, %v732
    %v734 = vpop.f32.mrf.mxu0
    %735 = vdwg.mxu0
    %736 = vmatpush.bf16.msra.mxu0 %v664
    %737 = vmatpush.bf16.msra.mxu0 %v662
    %738 = vmatpush.bf16.msra.mxu0 %v660
    %739 = vmatpush.bf16.msra.mxu0 %v658
    %740 = vmatpush.bf16.msra.mxu0 %v656
    %741 = vmatpush.bf16.msra.mxu0 %v654
    %742 = vmatpush.bf16.msra.mxu0 %v652
    %743 = vmatpush.bf16.msra.mxu0 %v650
    %744 = vmatmul.bf16.gmra.mxu0 %v498
    %v745 = vpop.f32.mrf.mxu0
    %v746 = vadd.f32 %v733, %v745
    %v747 = vpop.f32.mrf.mxu0
    %748 = vdwg.mxu0
    %vm749 = vcmp.gt.f32.partialorder %v720, 0.0
    %vm750 = vcmp.gt.f32.partialorder %v746, 0.0
    %v751 = vmul.f32 %v720, 1.442695
    %v752 = vpow.pop %v751
    %v753 = vmul.f32 %v746, 1.442695
    %v754 = vpow.pop %v753
    %v755 = vsub.f32 %v752, 1.0
    %v756 = vsub.f32 %v754, 1.0
    %v757 = vsel %vm749, %v720, %v755
    %v758 = vsel %vm750, %v746, %v756
    %v759 = vpack.c.bf16 %v757, %v757
    %v760 = vpack.c.bf16 %v758, %v758
    %v761 = vld [vmem:[#allocation7] sm:$0xf]
    %v762 = vld [vmem:[#allocation7 + $0x4] sm:$0xf]
    %v763 = vld [vmem:[#allocation7 + $0x8] sm:$0xf]
    %v764 = vld [vmem:[#allocation7 + $0xc] sm:$0xf]
    %v765 = vld [vmem:[#allocation7 + $0x10] sm:$0xf]
    %v766 = vld [vmem:[#allocation7 + $0x14] sm:$0xf]
    %v767 = vld [vmem:[#allocation7 + $0x18] sm:$0xf]
    %v768 = vld [vmem:[#allocation7 + $0x1c] sm:$0xf]
    %v769 = vld [vmem:[#allocation7 + $0x20] sm:$0xf]
    %v770 = vld [vmem:[#allocation7 + $0x24] sm:$0xf]
    %v771 = vld [vmem:[#allocation7 + $0x28] sm:$0xf]
    %v772 = vld [vmem:[#allocation7 + $0x2c] sm:$0xf]
    %v773 = vld [vmem:[#allocation7 + $0x30] sm:$0xf]
    %v774 = vld [vmem:[#allocation7 + $0x34] sm:$0xf]
    %v775 = vld [vmem:[#allocation7 + $0x38] sm:$0xf]
    %v776 = vld [vmem:[#allocation7 + $0x3c] sm:$0xf]
    %v777 = vld [vmem:[#allocation7 + $0x40] sm:$0xf]
    %v778 = vld [vmem:[#allocation7 + $0x44] sm:$0xf]
    %v779 = vld [vmem:[#allocation7 + $0x48] sm:$0xf]
    %v780 = vld [vmem:[#allocation7 + $0x4c] sm:$0xf]
    %v781 = vld [vmem:[#allocation7 + $0x50] sm:$0xf]
    %v782 = vld [vmem:[#allocation7 + $0x54] sm:$0xf]
    %v783 = vld [vmem:[#allocation7 + $0x58] sm:$0xf]
    %v784 = vld [vmem:[#allocation7 + $0x5c] sm:$0xf]
    %v785 = vld [vmem:[#allocation7 + $0x60] sm:$0xf]
    %v786 = vld [vmem:[#allocation7 + $0x64] sm:$0xf]
    %v787 = vld [vmem:[#allocation7 + $0x68] sm:$0xf]
    %v788 = vld [vmem:[#allocation7 + $0x6c] sm:$0xf]
    %v789 = vld [vmem:[#allocation7 + $0x70] sm:$0xf]
    %v790 = vld [vmem:[#allocation7 + $0x74] sm:$0xf]
    %v791 = vld [vmem:[#allocation7 + $0x78] sm:$0xf]
    %v792 = vld [vmem:[#allocation7 + $0x7c] sm:$0xf]
    %v793 = vld [vmem:[%s8] sm:$0x1]
    %v795 = vperm.slane %v793, 0
    %v829 = vunpack.c.l.b16 %v761
    %v830 = vunpack.c.l.b16 %v762
    %v831 = vunpack.c.l.b16 %v763
    %v832 = vunpack.c.l.b16 %v764
    %v833 = vunpack.c.l.b16 %v765
    %v834 = vunpack.c.l.b16 %v766
    %v835 = vunpack.c.l.b16 %v767
    %v836 = vunpack.c.l.b16 %v768
    %v837 = vunpack.c.l.b16 %v769
    %v838 = vunpack.c.l.b16 %v770
    %v839 = vunpack.c.l.b16 %v771
    %v840 = vunpack.c.l.b16 %v772
    %v841 = vunpack.c.l.b16 %v773
    %v842 = vunpack.c.l.b16 %v774
    %v843 = vunpack.c.l.b16 %v775
    %v844 = vunpack.c.l.b16 %v776
    %v845 = vunpack.c.l.b16 %v777
    %v846 = vunpack.c.l.b16 %v778
    %v847 = vunpack.c.l.b16 %v779
    %v848 = vunpack.c.l.b16 %v780
    %v849 = vunpack.c.l.b16 %v781
    %v850 = vunpack.c.l.b16 %v782
    %v851 = vunpack.c.l.b16 %v783
    %v852 = vunpack.c.l.b16 %v784
    %v853 = vunpack.c.l.b16 %v785
    %v854 = vunpack.c.l.b16 %v786
    %v855 = vunpack.c.l.b16 %v787
    %v856 = vunpack.c.l.b16 %v788
    %v857 = vunpack.c.l.b16 %v789
    %v858 = vunpack.c.l.b16 %v790
    %v859 = vunpack.c.l.b16 %v791
    %v860 = vunpack.c.l.b16 %v792
    %v861 = vpack.c.b16 %v830, %v829
    %v862 = vpack.c.b16 %v832, %v831
    %v863 = vpack.c.b16 %v834, %v833
    %v864 = vpack.c.b16 %v836, %v835
    %v865 = vpack.c.b16 %v838, %v837
    %v866 = vpack.c.b16 %v840, %v839
    %v867 = vpack.c.b16 %v842, %v841
    %v868 = vpack.c.b16 %v844, %v843
    %v869 = vpack.c.b16 %v846, %v845
    %v870 = vpack.c.b16 %v848, %v847
    %v871 = vpack.c.b16 %v850, %v849
    %v872 = vpack.c.b16 %v852, %v851
    %v873 = vpack.c.b16 %v854, %v853
    %v874 = vpack.c.b16 %v856, %v855
    %v875 = vpack.c.b16 %v858, %v857
    %v876 = vpack.c.b16 %v860, %v859
    %893 = vmatpush.bf16.msra.mxu0 %v868
    %894 = vmatpush.bf16.msra.mxu0 %v867
    %895 = vmatpush.bf16.msra.mxu0 %v866
    %896 = vmatpush.bf16.msra.mxu0 %v865
    %897 = vmatpush.bf16.msra.mxu0 %v864
    %898 = vmatpush.bf16.msra.mxu0 %v863
    %899 = vmatpush.bf16.msra.mxu0 %v862
    %900 = vmatpush.bf16.msra.mxu0 %v861
    %901 = vmatmul.bf16.gmra.mxu0 %v759
    %v902 = vpop.f32.mrf.mxu0
    %v903 = vadd.f32 %v795, %v902
    %v904 = vpop.f32.mrf.mxu0
    %905 = vdwg.mxu0
    %906 = vmatpush.bf16.msra.mxu0 %v876
    %907 = vmatpush.bf16.msra.mxu0 %v875
    %908 = vmatpush.bf16.msra.mxu0 %v874
    %909 = vmatpush.bf16.msra.mxu0 %v873
    %910 = vmatpush.bf16.msra.mxu0 %v872
    %911 = vmatpush.bf16.msra.mxu0 %v871
    %912 = vmatpush.bf16.msra.mxu0 %v870
    %913 = vmatpush.bf16.msra.mxu0 %v869
    %914 = vmatmul.bf16.gmra.mxu0 %v760
    %v915 = vpop.f32.mrf.mxu0
    %v916 = vadd.f32 %v903, %v915
    %v917 = vpop.f32.mrf.mxu0
    %918 = vdwg.mxu0
    %919 = vst [vmem:[%s9] sm:$0xff] %v916
    // Predicated region
    $region54: #{gating_network_forward.1} parent=1 // pred_check
      _
    $region55: #{gating_network_forward.1} parent=1 // pred_check_branch
      %921 = sbr.rel (0) target = $region57
    $region56: #{gating_network_forward.1} parent=1 // pred_region
      _
    $region57: #{gating_network_forward.1} parent=1 // pred_fallthru
      _
    // Predicated region
    $region58: #{gating_network_forward.1} parent=1 // pred_check
      _
    $region59: #{gating_network_forward.1} parent=1 // pred_check_branch
      %923 = sbr.rel (0) target = $region61
    $region60: #{gating_network_forward.1} parent=1 // pred_region
      _
    $region61: #{gating_network_forward.1} parent=1 // pred_fallthru
      _
    %924 = vsyncpa [#allocation3], 1
    %925 = vsyncpa [#allocation5], 1
    %926 = vsyncpa [#allocation8], 1

</llo_original>
